<compile_context>
chip_gen: v6e
topology: v6e:2x2x1
jax: 0.10.0
libtpu: 0.0.40
codegen_flags: <defaults>
</compile_context>

<pallas_src>
import math

import jax
import jax.numpy as jnp
from jax.experimental import pallas as pl
from jax.experimental.pallas import tpu as pltpu


def _round_up(x, m):
    return -(-x // m) * m


# ----------------------------------------------------------------------------
# Pallas kernel: both conv stacks (conv1 on width col 0, conv1_2 on col 1),
# one batch block per grid step, single fused pass.
# ----------------------------------------------------------------------------
def _fused_hough_kernel(x_ref, w1_ref, sc1_ref, sh1_ref,
                        w2_ref, sc2_ref, sh2_ref,
                        w3_ref, b3_ref, o_ref):
    """x_ref  : (bn, H+2, 2C)  per-item zero rows at 0 and H+1; lanes are
                               [col0 channels | col1 channels]
       w1_ref : (3, 2C, 2Ch)   per-tap block-diagonal 3x1-conv weights
       sc/sh  : (1, 2Ch)       folded conv-bias + inference BatchNorm
       w2_ref : (2Ch, 2Ch)     block-diagonal 1x1 conv
       w3_ref : (8, 2Ch)       final 1x1 conv rows (row0=col0, row1=col1, rest 0)
       b3_ref : (8, 1)         final conv biases (rows 0/1), zero elsewhere
       o_ref  : (8, bn*H)      lane-dense output slab; rows 0/1 are the two
                               width columns, lane index = local_b*H + h
    """
    bn, hp2, c2 = x_ref.shape
    h = hp2 - 2
    m = bn * h

    x = x_ref[...]                                              # (bn, H+2, 2C)

    # Conv2d(C, Ch, (3,1)) for both width columns: three per-tap matmuls
    # (K = 2C each) accumulated in f32.  Per-item zero pad rows make the
    # batch-folded M dimension seam-safe.
    acc = jnp.dot(x[:, 0:h, :].reshape(m, c2), w1_ref[0],
                  preferred_element_type=jnp.float32)
    acc = acc + jnp.dot(x[:, 1:h + 1, :].reshape(m, c2), w1_ref[1],
                        preferred_element_type=jnp.float32)
    acc = acc + jnp.dot(x[:, 2:h + 2, :].reshape(m, c2), w1_ref[2],
                        preferred_element_type=jnp.float32)
    y = jnp.maximum(acc * sc1_ref[...] + sh1_ref[...], 0.0)     # (m, 2Ch)

    # Conv2d(Ch, Ch, 1x1) + folded bias/BN + ReLU.
    z = jnp.dot(y.astype(w2_ref.dtype), w2_ref[...],
                preferred_element_type=jnp.float32)
    z = jnp.maximum(z * sc2_ref[...] + sh2_ref[...], 0.0)       # (m, 2Ch)

    # Conv2d(Ch, 1, 1x1) per column on the MXU in NT form so the result is
    # already lane-dense: (8, 2Ch) x (m, 2Ch)^T -> (8, m).
    out_t = jax.lax.dot_general(w3_ref[...], z, (((1,), (1,)), ((), ())),
                                preferred_element_type=jnp.float32)
    o_ref[...] = (out_t + b3_ref[...]).astype(o_ref.dtype)


# ----------------------------------------------------------------------------
# Block sizing / VMEM accounting.
# ----------------------------------------------------------------------------
def _vmem_capacity_bytes(default_bytes=64 << 20):
    try:
        return int(pltpu.get_tpu_info().vmem_capacity_bytes)
    except Exception:
        return default_bytes


def _choose_batch_block(n, h, hp2, c2, in_itemsize, budget_bytes):
    """Pick the per-grid-step batch block from an honest per-item VMEM
    estimate, constrained so the output block's lane extent (bn*h) is a
    multiple of 128 (or the block covers the whole batch), and preferring
    >=2 grid steps so v7x megacore can use both TensorCores."""
    lane_pad = lambda l: _round_up(max(int(l), 1), 128)
    ch2 = max(c2 // 2, 1)
    per_item = (
        2 * hp2 * lane_pad(c2) * in_itemsize      # input block (double-buffered)
        + 3 * h * lane_pad(c2) * in_itemsize      # shifted per-tap input copies
        + 3 * h * lane_pad(ch2) * 4               # f32 acc / y / z temporaries
        + 2 * 8 * h * 4                           # (8, bn*h) output (double-buffered)
    )
    bn = max(1, int(budget_bytes) // int(per_item))
    bn = min(bn, n)
    lane_mult = 128 // math.gcd(h, 128)           # bn % lane_mult == 0  <=>  (bn*h) % 128 == 0
    if bn >= n:
        bn = n
        if n > lane_mult:                         # split into >=2 blocks for megacore
            cand = _round_up(_round_up(n, 2) // 2, lane_mult)
            if cand < n:
                bn = cand
    if bn < n:
        bn = max(lane_mult, (bn // lane_mult) * lane_mult)
        steps = -(-n // bn)                       # rebalance to minimize batch padding
        bn = min(_round_up(-(-n // steps), lane_mult), n)
        if bn >= n:
            bn = n
    return bn


# ----------------------------------------------------------------------------
# pallas_call wrapper.
# ----------------------------------------------------------------------------
def fused_hough_head(x_packed, w1, sc1, sh1, w2, sc2, sh2, w3, b3,
                     *, batch_block=None):
    """x_packed: (N, H+2, 2*C_total), lanes = [col0 C | col1 C], zero rows at
    0 and H+1 per item.  Returns (N, H, 2) float32."""
    n, hp2, c2 = x_packed.shape
    h = hp2 - 2
    ch2 = c2 // 2

    vmem_cap = _vmem_capacity_bytes()
    vmem_limit = int(min(vmem_cap * 3 // 4, vmem_cap - (2 << 20)))
    if batch_block is None:
        batch_block = _choose_batch_block(n, h, hp2, c2,
                                          x_packed.dtype.itemsize,
                                          budget_bytes=vmem_limit // 2)
    n_pad = _round_up(n, batch_block)
    if n_pad != n:
        x_packed = jnp.pad(x_packed, ((0, n_pad - n), (0, 0), (0, 0)))
    grid = (n_pad // batch_block,)

    flops = 2 * n_pad * h * (3 * c2 * ch2 + ch2 * ch2 + 8 * ch2)
    bytes_accessed = (
        int(x_packed.size) * x_packed.dtype.itemsize
        + 8 * n_pad * h * 4
        + sum(int(a.size) * a.dtype.itemsize
              for a in (w1, sc1, sh1, w2, sc2, sh2, w3, b3)))
    cost = pl.CostEstimate(flops=int(flops), transcendentals=0,
                           bytes_accessed=int(bytes_accessed))

    in_specs = [
        pl.BlockSpec((batch_block, hp2, c2), lambda b: (b, 0, 0)),
        # Weights/scales: constant block index -> fetched once, VMEM-resident.
        pl.BlockSpec(w1.shape, lambda b: (0, 0, 0)),
        pl.BlockSpec(sc1.shape, lambda b: (0, 0)),
        pl.BlockSpec(sh1.shape, lambda b: (0, 0)),
        pl.BlockSpec(w2.shape, lambda b: (0, 0)),
        pl.BlockSpec(sc2.shape, lambda b: (0, 0)),
        pl.BlockSpec(sh2.shape, lambda b: (0, 0)),
        pl.BlockSpec(w3.shape, lambda b: (0, 0)),
        pl.BlockSpec(b3.shape, lambda b: (0, 0)),
    ]

    out = pl.pallas_call(
        _fused_hough_kernel,
        out_shape=jax.ShapeDtypeStruct((8, n_pad * h), jnp.float32),
        grid_spec=pltpu.PrefetchScalarGridSpec(
            num_scalar_prefetch=0,
            grid=grid,
            in_specs=in_specs,
            out_specs=pl.BlockSpec((8, batch_block * h), lambda b: (0, b)),
        ),
        compiler_params=pltpu.CompilerParams(
            dimension_semantics=("parallel",),
            vmem_limit_bytes=vmem_limit),
        cost_estimate=cost,
    )(x_packed, w1, sc1, sh1, w2, sc2, sh2, w3, b3)

    out = out[:2, :n * h].reshape(2, n, h)
    return jnp.moveaxis(out, 0, -1)                        # (N, H, 2)


# ----------------------------------------------------------------------------
# JAX glue: bilinear height-upsampling (align_corners=False) with the conv's
# zero padding folded into the interpolation matrix, and param packing.
# ----------------------------------------------------------------------------
def upsample_matrix(h_in, u):
    """Row-interpolation matrix matching nn.Upsample(scale_factor=(u, 1),
    mode='bilinear', align_corners=False)."""
    if u == 1:
        return jnp.eye(h_in, dtype=jnp.float32)
    h_out = int(h_in * u)
    dst = jnp.arange(h_out, dtype=jnp.float32)
    src = jnp.maximum((dst + 0.5) / float(u) - 0.5, 0.0)
    i0 = jnp.clip(jnp.floor(src).astype(jnp.int32), 0, h_in - 1)
    i1 = jnp.minimum(i0 + 1, h_in - 1)
    lam = src - i0.astype(jnp.float32)
    return ((1.0 - lam)[:, None] * jax.nn.one_hot(i0, h_in, dtype=jnp.float32)
            + lam[:, None] * jax.nn.one_hot(i1, h_in, dtype=jnp.float32))


def padded_upsample_matrix(h_in, u):
    """Upsample matrix with an extra zero row at the top and bottom: the conv's
    (1, 0) zero height-padding falls out of the upsample einsum for free."""
    u_mat = upsample_matrix(h_in, u)
    z = jnp.zeros((1, h_in), jnp.float32)
    return jnp.concatenate([z, u_mat, z], axis=0)


def make_conv_stack_params(key, c_in, c_mid, eps=1e-5):
    """Deterministic synthetic params for one conv1/conv1_2 stack; folds the
    conv biases and inference-mode BatchNorm into per-channel scale/shift."""
    ks = jax.random.split(key, 14)
    w1_t = 0.1 * jax.random.normal(ks[0], (c_mid, c_in, 3), jnp.float32)   # (out,in,kh)
    b1 = 0.1 * jax.random.normal(ks[1], (c_mid,), jnp.float32)
    g1 = 1.0 + 0.1 * jax.random.normal(ks[2], (c_mid,), jnp.float32)
    be1 = 0.1 * jax.random.normal(ks[3], (c_mid,), jnp.float32)
    m1 = 0.1 * jax.random.normal(ks[4], (c_mid,), jnp.float32)
    v1 = 1.0 + 0.1 * jax.random.uniform(ks[5], (c_mid,), jnp.float32)

    w2_t = 0.1 * jax.random.normal(ks[6], (c_mid, c_mid), jnp.float32)     # (out,in)
    b2 = 0.1 * jax.random.normal(ks[7], (c_mid,), jnp.float32)
    g2 = 1.0 + 0.1 * jax.random.normal(ks[8], (c_mid,), jnp.float32)
    be2 = 0.1 * jax.random.normal(ks[9], (c_mid,), jnp.float32)
    m2 = 0.1 * jax.random.normal(ks[10], (c_mid,), jnp.float32)
    v2 = 1.0 + 0.1 * jax.random.uniform(ks[11], (c_mid,), jnp.float32)

    w3_t = 0.1 * jax.random.normal(ks[12], (1, c_mid), jnp.float32)        # (out,in)
    b3 = 0.1 * jax.random.normal(ks[13], (1,), jnp.float32)

    s1 = g1 / jnp.sqrt(v1 + eps)
    t1 = (b1 - m1) * s1 + be1
    s2 = g2 / jnp.sqrt(v2 + eps)
    t2 = (b2 - m2) * s2 + be2

    return dict(
        w1=jnp.transpose(w1_t, (2, 1, 0)),   # (3, C, Ch): tap k == padded row h+k
        s1=s1, t1=t1,
        w2=jnp.transpose(w2_t, (1, 0)),      # (C_mid, C_mid) (in, out)
        s2=s2, t2=t2,
        w3=jnp.transpose(w3_t, (1, 0)),      # (C_mid, 1)
        b3=b3,
    )


def pack_two_column_params(p0, p1):
    """Pack conv1 (width col 0) and conv1_2 (col 1) into one block-diagonal
    parameter set so a single kernel pass computes both width columns."""
    k3, c, ch = p0['w1'].shape                          # (3, C_total, Ch)
    w1 = jnp.zeros((k3, 2 * c, 2 * ch), jnp.float32)
    w1 = w1.at[:, :c, :ch].set(p0['w1'])
    w1 = w1.at[:, c:, ch:].set(p1['w1'])

    sc1 = jnp.concatenate([p0['s1'], p1['s1']])[None, :]
    sh1 = jnp.concatenate([p0['t1'], p1['t1']])[None, :]

    w2 = jnp.zeros((2 * ch, 2 * ch), jnp.float32)
    w2 = w2.at[:ch, :ch].set(p0['w2'])
    w2 = w2.at[ch:, ch:].set(p1['w2'])

    sc2 = jnp.concatenate([p0['s2'], p1['s2']])[None, :]
    sh2 = jnp.concatenate([p0['t2'], p1['t2']])[None, :]

    # Final 1x1 conv as an (8, 2Ch) row block (rows 0/1 used, rest zero) so it
    # runs on the MXU in NT form and produces a lane-dense (8, m) result.
    w3 = jnp.zeros((8, 2 * ch), jnp.float32)
    w3 = w3.at[0, :ch].set(p0['w3'][:, 0])
    w3 = w3.at[1, ch:].set(p1['w3'][:, 0])
    b3 = jnp.zeros((8, 1), jnp.float32)
    b3 = b3.at[0, 0].set(p0['b3'][0])
    b3 = b3.at[1, 0].set(p1['b3'][0])
    return w1, sc1, sh1, w2, sc2, sh2, w3, b3


def fusion_hough_stage_forward(xs, upsample_rate, p0, p1,
                               *, matmul_dtype=jnp.bfloat16, batch_block=None):
    """JAX/Pallas equivalent of FusionHoughStage.forward (inference).
    xs: list of 5 NCHW arrays.  Returns (N, 1, H_out, 2) float32.

    matmul_dtype=bfloat16 (default) halves the kernel's input DMA / VMEM
    traffic; f32 accumulation and the f32 BN/ReLU epilogue stay inside the
    kernel.  Pass jnp.float32 for bit-level comparability."""
    ups = [jnp.einsum('oh,nchw->nowc', padded_upsample_matrix(x.shape[2], u), x)
           for x, u in zip(xs, upsample_rate)]
    # TODO(synk): like the reference module, only the first two width columns
    # are processed (conv1 / conv1_2); inputs with W > 2 would need more columns.
    concat = jnp.concatenate(ups, axis=-1)[:, :, :2, :]   # (N, H+2, 2, C_total)
    n, hp2, _, c_total = concat.shape
    x_packed = concat.reshape(n, hp2, 2 * c_total)        # lanes [col0 C | col1 C]
    x_packed = x_packed.astype(matmul_dtype)

    w1, sc1, sh1, w2, sc2, sh2, w3, b3 = pack_two_column_params(p0, p1)
    w1 = w1.astype(matmul_dtype)
    w2 = w2.astype(matmul_dtype)

    out = fused_hough_head(x_packed, w1, sc1, sh1, w2, sc2, sh2, w3, b3,
                           batch_block=batch_block)       # (N, H, 2)
    return out[:, None, :, :]                             # (N, 1, H, 2) NCHW


# ----------------------------------------------------------------------------
# Pure-JAX reference (independent math path, no Pallas) for correctness.
# ----------------------------------------------------------------------------
def ref_forward(xs, upsample_rate, p0, p1):
    ups = [jnp.einsum('oh,nchw->ncow', upsample_matrix(x.shape[2], u), x)
           for x, u in zip(xs, upsample_rate)]
    concat = jnp.concatenate(ups, axis=1)
    h = concat.shape[2]
    cols = []
    for j, p in enumerate((p0, p1)):
        xcol = concat[:, :, :, j]                               # (N, C, H)
        xpad = jnp.pad(xcol, ((0, 0), (0, 0), (1, 1)))
        y = sum(jnp.einsum('nch,co->noh', xpad[:, :, k:k + h], p['w1'][k])
                for k in range(3))
        y = jnp.maximum(y * p['s1'][None, :, None] + p['t1'][None, :, None], 0.0)
        z = jnp.einsum('nch,co->noh', y, p['w2'])
        z = jnp.maximum(z * p['s2'][None, :, None] + p['t2'][None, :, None], 0.0)
        o = jnp.einsum('nch,co->noh', z, p['w3']) + p['b3'][None, :, None]
        cols.append(o[:, :, :, None])
    return jnp.concatenate(cols, axis=3)


if __name__ == "__main__":
    key = jax.random.PRNGKey(0)
    keys = jax.random.split(key, 8)

    # Small config: per-input heights chosen so all upsample to H_out = 32.
    upsample_rate = [2, 4, 8, 8, 8]
    chans = [8, 8, 8, 4, 4]                      # c0..c4 -> c_total = 32
    n_batch, h_out = 2, 32
    c_total = sum(chans)
    c_mid = c_total // 2

    xs = [jax.random.normal(keys[i], (n_batch, c, h_out // u, 2), jnp.float32)
          for i, (c, u) in enumerate(zip(chans, upsample_rate))]

    p0 = make_conv_stack_params(keys[5], c_total, c_mid)   # conv1
    p1 = make_conv_stack_params(keys[6], c_total, c_mid)   # conv1_2

    ref = ref_forward(xs, upsample_rate, p0, p1)

    # f32 inputs: tight check of the kernel math against the JAX reference.
    prob_f32 = fusion_hough_stage_forward(xs, upsample_rate, p0, p1,
                                          matmul_dtype=jnp.float32)
    prob_f32 = jax.block_until_ready(prob_f32)
    assert prob_f32.shape == (n_batch, 1, h_out, 2), prob_f32.shape
    if not bool(jnp.allclose(prob_f32, ref, rtol=2e-3, atol=2e-3)):
        raise SystemExit("Pallas f32 output does not match JAX reference")

    # bf16 inputs (perf default on v6e/v7x): relaxed tolerance.
    prob_bf16 = fusion_hough_stage_forward(xs, upsample_rate, p0, p1)
    prob_bf16 = jax.block_until_ready(prob_bf16)
    assert prob_bf16.shape == (n_batch, 1, h_out, 2), prob_bf16.shape
    if not bool(jnp.allclose(prob_bf16, ref, rtol=3e-2, atol=3e-2)):
        raise SystemExit("Pallas bf16 output does not match JAX reference")

    print("KERNEL_OK")
</pallas_src>

<mosaic_0001>
module attributes {stable_mosaic.version = 11 : i64} {
  func.func @_fused_hough_kernel(%arg0: i32, %arg1: memref<2x34x64xf32, #tpu.memory_space<vmem>>, %arg2: memref<3x64x32xf32, #tpu.memory_space<vmem>>, %arg3: memref<1x32xf32, #tpu.memory_space<vmem>>, %arg4: memref<1x32xf32, #tpu.memory_space<vmem>>, %arg5: memref<32x32xf32, #tpu.memory_space<vmem>>, %arg6: memref<1x32xf32, #tpu.memory_space<vmem>>, %arg7: memref<1x32xf32, #tpu.memory_space<vmem>>, %arg8: memref<8x32xf32, #tpu.memory_space<vmem>>, %arg9: memref<8x1xf32, #tpu.memory_space<vmem>>, %arg10: memref<8x64xf32, #tpu.memory_space<vmem>>) attributes {dimension_semantics = [#tpu.dimension_semantics<parallel>], iteration_bounds = array<i64: 1>, scalar_prefetch = 0 : i64, scratch_operands = 0 : i64, tpu.core_type = #tpu.core_type<tc>, window_params = [{transform_indices = @transform_0, window_bounds = array<i64: 2, 34, 64>}, {pipeline_mode = #tpu.pipeline_mode<synchronous>, transform_indices = @transform_1, window_bounds = array<i64: 3, 64, 32>}, {pipeline_mode = #tpu.pipeline_mode<synchronous>, transform_indices = @transform_2, window_bounds = array<i64: 1, 32>}, {pipeline_mode = #tpu.pipeline_mode<synchronous>, transform_indices = @transform_3, window_bounds = array<i64: 1, 32>}, {pipeline_mode = #tpu.pipeline_mode<synchronous>, transform_indices = @transform_4, window_bounds = array<i64: 32, 32>}, {pipeline_mode = #tpu.pipeline_mode<synchronous>, transform_indices = @transform_5, window_bounds = array<i64: 1, 32>}, {pipeline_mode = #tpu.pipeline_mode<synchronous>, transform_indices = @transform_6, window_bounds = array<i64: 1, 32>}, {pipeline_mode = #tpu.pipeline_mode<synchronous>, transform_indices = @transform_7, window_bounds = array<i64: 8, 32>}, {pipeline_mode = #tpu.pipeline_mode<synchronous>, transform_indices = @transform_8, window_bounds = array<i64: 8, 1>}, {transform_indices = @transform_9, window_bounds = array<i64: 8, 64>}]} {
    %c0 = arith.constant 0 : index
    %c0_0 = arith.constant 0 : index
    %c0_1 = arith.constant 0 : index
    %0 = vector.load %arg1[%c0, %c0_0, %c0_1] : memref<2x34x64xf32, #tpu.memory_space<vmem>>, vector<2x34x64xf32>
    %1 = vector.extract_strided_slice %0 {offsets = [0, 0, 0], sizes = [2, 32, 64], strides = [1, 1, 1]} : vector<2x34x64xf32> to vector<2x32x64xf32>
    %2 = vector.shape_cast %1 : vector<2x32x64xf32> to vector<64x64xf32>
    %c0_2 = arith.constant 0 : index
    %c0_3 = arith.constant 0 : index
    %c0_4 = arith.constant 0 : index
    %3 = vector.load %arg2[%c0_2, %c0_3, %c0_4] : memref<3x64x32xf32, #tpu.memory_space<vmem>>, vector<1x64x32xf32>
    %4 = vector.shape_cast %3 : vector<1x64x32xf32> to vector<64x32xf32>
    %cst = arith.constant dense<0.000000e+00> : vector<64x32xf32>
    %5 = tpu.matmul %2, %4, %cst {dimension_numbers = #tpu.dot_dimension_numbers<[1], [0], [0], [1], [0, 0, 1, 1], [], []>} : vector<64x64xf32>, vector<64x32xf32>, vector<64x32xf32> -> vector<64x32xf32>
    %6 = vector.extract_strided_slice %0 {offsets = [0, 1, 0], sizes = [2, 32, 64], strides = [1, 1, 1]} : vector<2x34x64xf32> to vector<2x32x64xf32>
    %7 = vector.shape_cast %6 : vector<2x32x64xf32> to vector<64x64xf32>
    %c1 = arith.constant 1 : index
    %c0_5 = arith.constant 0 : index
    %c0_6 = arith.constant 0 : index
    %8 = vector.load %arg2[%c1, %c0_5, %c0_6] : memref<3x64x32xf32, #tpu.memory_space<vmem>>, vector<1x64x32xf32>
    %9 = vector.shape_cast %8 : vector<1x64x32xf32> to vector<64x32xf32>
    %cst_7 = arith.constant dense<0.000000e+00> : vector<64x32xf32>
    %10 = tpu.matmul %7, %9, %cst_7 {dimension_numbers = #tpu.dot_dimension_numbers<[1], [0], [0], [1], [0, 0, 1, 1], [], []>} : vector<64x64xf32>, vector<64x32xf32>, vector<64x32xf32> -> vector<64x32xf32>
    %11 = arith.addf %5, %10 : vector<64x32xf32>
    %12 = vector.extract_strided_slice %0 {offsets = [0, 2, 0], sizes = [2, 32, 64], strides = [1, 1, 1]} : vector<2x34x64xf32> to vector<2x32x64xf32>
    %13 = vector.shape_cast %12 : vector<2x32x64xf32> to vector<64x64xf32>
    %c2 = arith.constant 2 : index
    %c0_8 = arith.constant 0 : index
    %c0_9 = arith.constant 0 : index
    %14 = vector.load %arg2[%c2, %c0_8, %c0_9] : memref<3x64x32xf32, #tpu.memory_space<vmem>>, vector<1x64x32xf32>
    %15 = vector.shape_cast %14 : vector<1x64x32xf32> to vector<64x32xf32>
    %cst_10 = arith.constant dense<0.000000e+00> : vector<64x32xf32>
    %16 = tpu.matmul %13, %15, %cst_10 {dimension_numbers = #tpu.dot_dimension_numbers<[1], [0], [0], [1], [0, 0, 1, 1], [], []>} : vector<64x64xf32>, vector<64x32xf32>, vector<64x32xf32> -> vector<64x32xf32>
    %17 = arith.addf %11, %16 : vector<64x32xf32>
    %c0_11 = arith.constant 0 : index
    %c0_12 = arith.constant 0 : index
    %18 = vector.load %arg3[%c0_11, %c0_12] : memref<1x32xf32, #tpu.memory_space<vmem>>, vector<1x32xf32>
    %19 = vector.broadcast %18 : vector<1x32xf32> to vector<64x32xf32>
    %20 = arith.mulf %17, %19 : vector<64x32xf32>
    %c0_13 = arith.constant 0 : index
    %c0_14 = arith.constant 0 : index
    %21 = vector.load %arg4[%c0_13, %c0_14] : memref<1x32xf32, #tpu.memory_space<vmem>>, vector<1x32xf32>
    %22 = vector.broadcast %21 : vector<1x32xf32> to vector<64x32xf32>
    %23 = arith.addf %20, %22 : vector<64x32xf32>
    %cst_15 = arith.constant 0.000000e+00 : f32
    %24 = vector.broadcast %cst_15 : f32 to vector<64x32xf32>
    %25 = arith.maximumf %23, %24 : vector<64x32xf32>
    %c0_16 = arith.constant 0 : index
    %c0_17 = arith.constant 0 : index
    %26 = vector.load %arg5[%c0_16, %c0_17] : memref<32x32xf32, #tpu.memory_space<vmem>>, vector<32x32xf32>
    %cst_18 = arith.constant dense<0.000000e+00> : vector<64x32xf32>
    %27 = tpu.matmul %25, %26, %cst_18 {dimension_numbers = #tpu.dot_dimension_numbers<[1], [0], [0], [1], [0, 0, 1, 1], [], []>} : vector<64x32xf32>, vector<32x32xf32>, vector<64x32xf32> -> vector<64x32xf32>
    %c0_19 = arith.constant 0 : index
    %c0_20 = arith.constant 0 : index
    %28 = vector.load %arg6[%c0_19, %c0_20] : memref<1x32xf32, #tpu.memory_space<vmem>>, vector<1x32xf32>
    %29 = vector.broadcast %28 : vector<1x32xf32> to vector<64x32xf32>
    %30 = arith.mulf %27, %29 : vector<64x32xf32>
    %c0_21 = arith.constant 0 : index
    %c0_22 = arith.constant 0 : index
    %31 = vector.load %arg7[%c0_21, %c0_22] : memref<1x32xf32, #tpu.memory_space<vmem>>, vector<1x32xf32>
    %32 = vector.broadcast %31 : vector<1x32xf32> to vector<64x32xf32>
    %33 = arith.addf %30, %32 : vector<64x32xf32>
    %cst_23 = arith.constant 0.000000e+00 : f32
    %34 = vector.broadcast %cst_23 : f32 to vector<64x32xf32>
    %35 = arith.maximumf %33, %34 : vector<64x32xf32>
    %c0_24 = arith.constant 0 : index
    %c0_25 = arith.constant 0 : index
    %36 = vector.load %arg8[%c0_24, %c0_25] : memref<8x32xf32, #tpu.memory_space<vmem>>, vector<8x32xf32>
    %cst_26 = arith.constant dense<0.000000e+00> : vector<8x64xf32>
    %37 = tpu.matmul %36, %35, %cst_26 {dimension_numbers = #tpu.dot_dimension_numbers<[1], [1], [0], [0], [0, 0, 1, 0], [], []>} : vector<8x32xf32>, vector<64x32xf32>, vector<8x64xf32> -> vector<8x64xf32>
    %c0_27 = arith.constant 0 : index
    %c0_28 = arith.constant 0 : index
    %38 = vector.load %arg9[%c0_27, %c0_28] : memref<8x1xf32, #tpu.memory_space<vmem>>, vector<8x1xf32>
    %39 = vector.broadcast %38 : vector<8x1xf32> to vector<8x64xf32>
    %40 = arith.addf %37, %39 : vector<8x64xf32>
    %c0_29 = arith.constant 0 : index
    %c0_30 = arith.constant 0 : index
    %41 = vector.load %arg10[%c0_29, %c0_30] : memref<8x64xf32, #tpu.memory_space<vmem>>, vector<8x64xf32>
    tpu.vector_store %arg10[%c0_29, %c0_30], %40 {strides = array<i32>} : memref<8x64xf32, #tpu.memory_space<vmem>>, vector<8x64xf32>,
    return
  }
  func.func @transform_0(%arg0: i32) -> (i32, i32, i32) {
    %c0_i32 = arith.constant 0 : i32
    %c0_i32_0 = arith.constant 0 : i32
    %c0_i32_1 = arith.constant 0 : i32
    return %arg0, %c0_i32, %c0_i32_0 : i32, i32, i32
  }
  func.func @transform_1(%arg0: i32) -> (i32, i32, i32) {
    %c0_i32 = arith.constant 0 : i32
    %c0_i32_0 = arith.constant 0 : i32
    %c0_i32_1 = arith.constant 0 : i32
    %c0_i32_2 = arith.constant 0 : i32
    return %c0_i32, %c0_i32_0, %c0_i32_1 : i32, i32, i32
  }
  func.func @transform_2(%arg0: i32) -> (i32, i32) {
    %c0_i32 = arith.constant 0 : i32
    %c0_i32_0 = arith.constant 0 : i32
    %c0_i32_1 = arith.constant 0 : i32
    return %c0_i32, %c0_i32_0 : i32, i32
  }
  func.func @transform_3(%arg0: i32) -> (i32, i32) {
    %c0_i32 = arith.constant 0 : i32
    %c0_i32_0 = arith.constant 0 : i32
    %c0_i32_1 = arith.constant 0 : i32
    return %c0_i32, %c0_i32_0 : i32, i32
  }
  func.func @transform_4(%arg0: i32) -> (i32, i32) {
    %c0_i32 = arith.constant 0 : i32
    %c0_i32_0 = arith.constant 0 : i32
    %c0_i32_1 = arith.constant 0 : i32
    return %c0_i32, %c0_i32_0 : i32, i32
  }
  func.func @transform_5(%arg0: i32) -> (i32, i32) {
    %c0_i32 = arith.constant 0 : i32
    %c0_i32_0 = arith.constant 0 : i32
    %c0_i32_1 = arith.constant 0 : i32
    return %c0_i32, %c0_i32_0 : i32, i32
  }
  func.func @transform_6(%arg0: i32) -> (i32, i32) {
    %c0_i32 = arith.constant 0 : i32
    %c0_i32_0 = arith.constant 0 : i32
    %c0_i32_1 = arith.constant 0 : i32
    return %c0_i32, %c0_i32_0 : i32, i32
  }
  func.func @transform_7(%arg0: i32) -> (i32, i32) {
    %c0_i32 = arith.constant 0 : i32
    %c0_i32_0 = arith.constant 0 : i32
    %c0_i32_1 = arith.constant 0 : i32
    return %c0_i32, %c0_i32_0 : i32, i32
  }
  func.func @transform_8(%arg0: i32) -> (i32, i32) {
    %c0_i32 = arith.constant 0 : i32
    %c0_i32_0 = arith.constant 0 : i32
    %c0_i32_1 = arith.constant 0 : i32
    return %c0_i32, %c0_i32_0 : i32, i32
  }
  func.func @transform_9(%arg0: i32) -> (i32, i32) {
    %c0_i32 = arith.constant 0 : i32
    %c0_i32_0 = arith.constant 0 : i32
    return %c0_i32, %arg0 : i32, i32
  }
}

</mosaic_0001>

<llo_original>
// kernel: tpu_custom_call.1
$region0: #{tpu_custom_call.1}
  #allocation0 [shape = 'u32[]', space=smem, size = 0x4, offset = 0x4, fixed_abs, tag = 'smem constant byte address 0x4 - core index']
  #allocation1 [shape = 'u32[144,128]{1,0:T(1,128)}', space=vmem, size = 0x12000, scoped, tag = 'internal scratch']
  %s0 = inlined_call_operand.vmem [shape: f32[2,34,64], index: 0, kind: input, shape index: {}]
  %s1 = inlined_call_operand.vmem [shape: f32[3,64,32], index: 1, kind: input, shape index: {}]
  %s2 = inlined_call_operand.vmem [shape: f32[1,32], index: 2, kind: input, shape index: {}]
  %s3 = inlined_call_operand.vmem [shape: f32[1,32], index: 3, kind: input, shape index: {}]
  %s4 = inlined_call_operand.vmem [shape: f32[32,32], index: 4, kind: input, shape index: {}]
  %s5 = inlined_call_operand.vmem [shape: f32[1,32], index: 5, kind: input, shape index: {}]
  %s6 = inlined_call_operand.vmem [shape: f32[1,32], index: 6, kind: input, shape index: {}]
  %s7 = inlined_call_operand.vmem [shape: f32[8,32], index: 7, kind: input, shape index: {}]
  %s8 = inlined_call_operand.vmem [shape: f32[8,1], index: 8, kind: input, shape index: {}]
  %s9 = inlined_call_operand.hbm [shape: f32[8,64], index: 9, kind: output, shape index: {}]
  %s10 = sld [smem:[#allocation0]]
  $region46: #{tpu_custom_call.1} parent=0
    _
  %s12 = ssub.s32 1, %s10
  %s13 = scalar_select 0, %s12, %s10
  $region1: #{tpu_custom_call.1} parent=0
    #allocation2 [shape = 'u8[4096]{0}', space=vmem, size = 0x1000, scoped, tag = 'output window, operand 0, single buffered']
    #allocation3 [shape = 's32[1]{0}', space=sflag, size = 0x4, scoped, tag = 'scoped memory for tpu_custom_call.1']
    %14 = vsyncpa [#allocation3], 0
    // Predicated region
    $region2: #{tpu_custom_call.1} parent=1 // pred_check
      _
    $region3: #{tpu_custom_call.1} parent=1 // pred_check_branch
      %16 = sbr.rel (0) target = $region5
    $region4: #{tpu_custom_call.1} parent=1 // pred_region
      _
    $region5: #{tpu_custom_call.1} parent=1 // pred_fallthru
      _
    // Predicated region
    $region6: #{tpu_custom_call.1} parent=1 // pred_check
      _
    $region7: #{tpu_custom_call.1} parent=1 // pred_check_branch
      %18 = sbr.rel (0) target = $region9
    $region8: #{tpu_custom_call.1} parent=1 // pred_region
      _
    $region9: #{tpu_custom_call.1} parent=1 // pred_fallthru
      _
    // Predicated region
    $region10: #{tpu_custom_call.1} parent=1 // pred_check
      _
    $region11: #{tpu_custom_call.1} parent=1 // pred_check_branch
      %20 = sbr.rel (0) target = $region13
    $region12: #{tpu_custom_call.1} parent=1 // pred_region
      _
    $region13: #{tpu_custom_call.1} parent=1 // pred_fallthru
      _
    // Predicated region
    $region14: #{tpu_custom_call.1} parent=1 // pred_check
      _
    $region15: #{tpu_custom_call.1} parent=1 // pred_check_branch
      %22 = sbr.rel (0) target = $region17
    $region16: #{tpu_custom_call.1} parent=1 // pred_region
      _
    $region17: #{tpu_custom_call.1} parent=1 // pred_fallthru
      _
    // Predicated region
    $region18: #{tpu_custom_call.1} parent=1 // pred_check
      _
    $region19: #{tpu_custom_call.1} parent=1 // pred_check_branch
      %24 = sbr.rel (0) target = $region21
    $region20: #{tpu_custom_call.1} parent=1 // pred_region
      _
    $region21: #{tpu_custom_call.1} parent=1 // pred_fallthru
      _
    // Predicated region
    $region22: #{tpu_custom_call.1} parent=1 // pred_check
      _
    $region23: #{tpu_custom_call.1} parent=1 // pred_check_branch
      %26 = sbr.rel (0) target = $region25
    $region24: #{tpu_custom_call.1} parent=1 // pred_region
      _
    $region25: #{tpu_custom_call.1} parent=1 // pred_fallthru
      _
    // Predicated region
    $region26: #{tpu_custom_call.1} parent=1 // pred_check
      _
    $region27: #{tpu_custom_call.1} parent=1 // pred_check_branch
      %28 = sbr.rel (0) target = $region29
    $region28: #{tpu_custom_call.1} parent=1 // pred_region
      _
    $region29: #{tpu_custom_call.1} parent=1 // pred_fallthru
      _
    // Predicated region
    $region30: #{tpu_custom_call.1} parent=1 // pred_check
      _
    $region31: #{tpu_custom_call.1} parent=1 // pred_check_branch
      %30 = sbr.rel (0) target = $region33
    $region32: #{tpu_custom_call.1} parent=1 // pred_region
      _
    $region33: #{tpu_custom_call.1} parent=1 // pred_fallthru
      _
    // Predicated region
    $region34: #{tpu_custom_call.1} parent=1 // pred_check
      _
    $region35: #{tpu_custom_call.1} parent=1 // pred_check_branch
      %32 = sbr.rel (0) target = $region37
    $region36: #{tpu_custom_call.1} parent=1 // pred_region
      _
    $region37: #{tpu_custom_call.1} parent=1 // pred_fallthru
      _
    %v33 = vld [vmem:[%s0] sm:$0xff]
    %v34 = vld [vmem:[%s0 + $0x8] sm:$0xff]
    %v35 = vld [vmem:[%s0 + $0x10] sm:$0xff]
    %v36 = vld [vmem:[%s0 + $0x18] sm:$0xff]
    %v37 = vld [vmem:[%s0 + $0x20] sm:$0x3]
    %v38 = vld [vmem:[%s0 + $0x28] sm:$0xff]
    %v39 = vld [vmem:[%s0 + $0x30] sm:$0xff]
    %v40 = vld [vmem:[%s0 + $0x38] sm:$0xff]
    %v41 = vld [vmem:[%s0 + $0x40] sm:$0xff]
    %v42 = vld [vmem:[%s0 + $0x48] sm:$0x3]
    %v43 = vld [vmem:[%s1] sm:$0xff]
    %v44 = vld [vmem:[%s1 + $0x8] sm:$0xff]
    %v45 = vld [vmem:[%s1 + $0x10] sm:$0xff]
    %v46 = vld [vmem:[%s1 + $0x18] sm:$0xff]
    %v47 = vld [vmem:[%s1 + $0x20] sm:$0xff]
    %v48 = vld [vmem:[%s1 + $0x28] sm:$0xff]
    %v49 = vld [vmem:[%s1 + $0x30] sm:$0xff]
    %v50 = vld [vmem:[%s1 + $0x38] sm:$0xff]
    %vm61 = vcmask 1046528
    %v62 = vrot.slane %v33, 1
    %v63 = vrot.slane %v34, 1
    %v64 = vsel %vm61, %v62, %v63
    %v65 = vrot.slane %v35, 1
    %v66 = vsel %vm61, %v63, %v65
    %v67 = vrot.slane %v36, 1
    %v68 = vsel %vm61, %v65, %v67
    %v69 = vrot.slane %v37, 1
    %v70 = vsel %vm61, %v67, %v69
    %v71 = vrot.slane %v38, 1
    %v72 = vrot.slane %v39, 1
    %v73 = vsel %vm61, %v71, %v72
    %v74 = vrot.slane %v40, 1
    %v75 = vsel %vm61, %v72, %v74
    %v76 = vrot.slane %v41, 1
    %v77 = vsel %vm61, %v74, %v76
    %v78 = vrot.slane %v42, 1
    %v79 = vsel %vm61, %v76, %v78
    %s80 = scalar_lea.vmem %s1, 64
    %v81 = vld [vmem:[%s80] sm:$0xff]
    %v82 = vld [vmem:[%s80 + $0x8] sm:$0xff]
    %v83 = vld [vmem:[%s80 + $0x10] sm:$0xff]
    %v84 = vld [vmem:[%s80 + $0x18] sm:$0xff]
    %v85 = vld [vmem:[%s80 + $0x20] sm:$0xff]
    %v86 = vld [vmem:[%s80 + $0x28] sm:$0xff]
    %v87 = vld [vmem:[%s80 + $0x30] sm:$0xff]
    %v88 = vld [vmem:[%s80 + $0x38] sm:$0xff]
    %vm89 = vcmask 523264
    %v90 = vsel %vm89, %v64, 0
    %v92 = vsel %vm89, %v66, 0
    %v94 = vsel %vm89, %v68, 0
    %v96 = vsel %vm89, %v70, 0
    %v98 = vsel %vm89, %v73, 0
    %v100 = vsel %vm89, %v75, 0
    %v102 = vsel %vm89, %v77, 0
    %v104 = vsel %vm89, %v79, 0
    %106 = vmatprep.subr.mxu0 0.0
    %107 = vmatpush1.msra.mxu0 0.0
    %108 = vmatprep.subr.mxu0 0.0
    %109 = vmatpush1.msra.mxu0 0.0
    %110 = vmatprep.subr.mxu0 0.0
    %111 = vmatpush1.msra.mxu0 0.0
    %112 = vmatprep.subr.mxu0 0.0
    %113 = vmatpush1.msra.mxu0 0.0
    %114 = vmatprep.subr.mxu0 0.0
    %115 = vmatpush1.msra.mxu0 0.0
    %116 = vmatprep.subr.mxu0 0.0
    %117 = vmatpush1.msra.mxu0 0.0
    %118 = vmatprep.subr.mxu0 0.0
    %119 = vmatpush1.msra.mxu0 0.0
    %120 = vmatprep.subr.mxu0 0.0
    %121 = vmatpush1.msra.mxu0 0.0
    %122 = vmatprep.subr.mxu0 0.0
    %123 = vmatpush1.msra.mxu0 %v88
    %124 = vmatprep.subr.mxu0 0.0
    %125 = vmatpush1.msra.mxu0 %v87
    %126 = vmatprep.subr.mxu0 0.0
    %127 = vmatpush1.msra.mxu0 %v86
    %128 = vmatprep.subr.mxu0 0.0
    %129 = vmatpush1.msra.mxu0 %v85
    %130 = vmatprep.subr.mxu0 0.0
    %131 = vmatpush1.msra.mxu0 %v84
    %132 = vmatprep.subr.mxu0 0.0
    %133 = vmatpush1.msra.mxu0 %v83
    %134 = vmatprep.subr.mxu0 0.0
    %135 = vmatpush1.msra.mxu0 %v82
    %136 = vmatprep.subr.mxu0 0.0
    %137 = vmatpush1.msra.mxu0 %v81
    %138 = vmatprep.subr.mxu0 0.0
    %139 = vmatpush2.msra.mxu0 0.0
    %140 = vmatprep.subr.mxu0 0.0
    %141 = vmatpush2.msra.mxu0 0.0
    %142 = vmatprep.subr.mxu0 0.0
    %143 = vmatpush2.msra.mxu0 0.0
    %144 = vmatprep.subr.mxu0 0.0
    %145 = vmatpush2.msra.mxu0 0.0
    %146 = vmatprep.subr.mxu0 0.0
    %147 = vmatpush2.msra.mxu0 0.0
    %148 = vmatprep.subr.mxu0 0.0
    %149 = vmatpush2.msra.mxu0 0.0
    %150 = vmatprep.subr.mxu0 0.0
    %151 = vmatpush2.msra.mxu0 0.0
    %152 = vmatprep.subr.mxu0 0.0
    %153 = vmatpush2.msra.mxu0 0.0
    %154 = vmatprep.subr.mxu0 0.0
    %155 = vmatpush2.msra.mxu0 0.0
    %156 = vmatprep.subr.mxu0 0.0
    %157 = vmatpush2.msra.mxu0 0.0
    %158 = vmatprep.subr.mxu0 0.0
    %159 = vmatpush2.msra.mxu0 0.0
    %160 = vmatprep.subr.mxu0 0.0
    %161 = vmatpush2.msra.mxu0 0.0
    %162 = vmatprep.subr.mxu0 0.0
    %163 = vmatpush2.msra.mxu0 0.0
    %164 = vmatprep.subr.mxu0 0.0
    %165 = vmatpush2.msra.mxu0 0.0
    %166 = vmatprep.subr.mxu0 0.0
    %167 = vmatpush2.msra.mxu0 0.0
    %168 = vmatprep.subr.mxu0 0.0
    %169 = vmatpush2.msra.mxu0 0.0
    %170 = vmatprep.mubr.f32.mxu0 0.0
    %171 = vmatmul.mubr.f32.gmra.mxu0 %v90
    %v172 = vpop.f32.mrf.mxu0
    %v173 = vadd.f32 0.0, %v172
    %v174 = vpop.f32.mrf.mxu0
    %175 = vmatprep.mubr.f32.mxu0 0.0
    %176 = vmatmul.mubr.f32.gmra.mxu0 %v92
    %v177 = vpop.f32.mrf.mxu0
    %v178 = vadd.f32 0.0, %v177
    %v179 = vpop.f32.mrf.mxu0
    %180 = vmatprep.mubr.f32.mxu0 0.0
    %181 = vmatmul.mubr.f32.gmra.mxu0 %v94
    %v182 = vpop.f32.mrf.mxu0
    %v183 = vadd.f32 0.0, %v182
    %v184 = vpop.f32.mrf.mxu0
    %185 = vmatprep.mubr.f32.mxu0 0.0
    %186 = vmatmul.mubr.f32.gmra.mxu0 %v96
    %v187 = vpop.f32.mrf.mxu0
    %v188 = vadd.f32 0.0, %v187
    %v189 = vpop.f32.mrf.mxu0
    %190 = vmatprep.mubr.f32.mxu0 0.0
    %191 = vmatmul.mubr.f32.gmra.mxu0 %v98
    %v192 = vpop.f32.mrf.mxu0
    %v193 = vadd.f32 0.0, %v192
    %v194 = vpop.f32.mrf.mxu0
    %195 = vmatprep.mubr.f32.mxu0 0.0
    %196 = vmatmul.mubr.f32.gmra.mxu0 %v100
    %v197 = vpop.f32.mrf.mxu0
    %v198 = vadd.f32 0.0, %v197
    %v199 = vpop.f32.mrf.mxu0
    %200 = vmatprep.mubr.f32.mxu0 0.0
    %201 = vmatmul.mubr.f32.gmra.mxu0 %v102
    %v202 = vpop.f32.mrf.mxu0
    %v203 = vadd.f32 0.0, %v202
    %v204 = vpop.f32.mrf.mxu0
    %205 = vmatprep.mubr.f32.mxu0 0.0
    %206 = vmatmul.mubr.f32.gmra.mxu0 %v104
    %v207 = vpop.f32.mrf.mxu0
    %v208 = vadd.f32 0.0, %v207
    %v209 = vpop.f32.mrf.mxu0
    %210 = vdwg.mxu0
    %v211 = vsel %vm89, %v33, 0
    %v213 = vsel %vm89, %v34, 0
    %v215 = vsel %vm89, %v35, 0
    %v217 = vsel %vm89, %v36, 0
    %v219 = vsel %vm89, %v38, 0
    %v221 = vsel %vm89, %v39, 0
    %v223 = vsel %vm89, %v40, 0
    %v225 = vsel %vm89, %v41, 0
    %227 = vmatprep.subr.mxu0 0.0
    %228 = vmatpush1.msra.mxu0 0.0
    %229 = vmatprep.subr.mxu0 0.0
    %230 = vmatpush1.msra.mxu0 0.0
    %231 = vmatprep.subr.mxu0 0.0
    %232 = vmatpush1.msra.mxu0 0.0
    %233 = vmatprep.subr.mxu0 0.0
    %234 = vmatpush1.msra.mxu0 0.0
    %235 = vmatprep.subr.mxu0 0.0
    %236 = vmatpush1.msra.mxu0 0.0
    %237 = vmatprep.subr.mxu0 0.0
    %238 = vmatpush1.msra.mxu0 0.0
    %239 = vmatprep.subr.mxu0 0.0
    %240 = vmatpush1.msra.mxu0 0.0
    %241 = vmatprep.subr.mxu0 0.0
    %242 = vmatpush1.msra.mxu0 0.0
    %243 = vmatprep.subr.mxu0 0.0
    %244 = vmatpush1.msra.mxu0 %v50
    %245 = vmatprep.subr.mxu0 0.0
    %246 = vmatpush1.msra.mxu0 %v49
    %247 = vmatprep.subr.mxu0 0.0
    %248 = vmatpush1.msra.mxu0 %v48
    %249 = vmatprep.subr.mxu0 0.0
    %250 = vmatpush1.msra.mxu0 %v47
    %251 = vmatprep.subr.mxu0 0.0
    %252 = vmatpush1.msra.mxu0 %v46
    %253 = vmatprep.subr.mxu0 0.0
    %254 = vmatpush1.msra.mxu0 %v45
    %255 = vmatprep.subr.mxu0 0.0
    %256 = vmatpush1.msra.mxu0 %v44
    %257 = vmatprep.subr.mxu0 0.0
    %258 = vmatpush1.msra.mxu0 %v43
    %259 = vmatprep.subr.mxu0 0.0
    %260 = vmatpush2.msra.mxu0 0.0
    %261 = vmatprep.subr.mxu0 0.0
    %262 = vmatpush2.msra.mxu0 0.0
    %263 = vmatprep.subr.mxu0 0.0
    %264 = vmatpush2.msra.mxu0 0.0
    %265 = vmatprep.subr.mxu0 0.0
    %266 = vmatpush2.msra.mxu0 0.0
    %267 = vmatprep.subr.mxu0 0.0
    %268 = vmatpush2.msra.mxu0 0.0
    %269 = vmatprep.subr.mxu0 0.0
    %270 = vmatpush2.msra.mxu0 0.0
    %271 = vmatprep.subr.mxu0 0.0
    %272 = vmatpush2.msra.mxu0 0.0
    %273 = vmatprep.subr.mxu0 0.0
    %274 = vmatpush2.msra.mxu0 0.0
    %275 = vmatprep.subr.mxu0 0.0
    %276 = vmatpush2.msra.mxu0 0.0
    %277 = vmatprep.subr.mxu0 0.0
    %278 = vmatpush2.msra.mxu0 0.0
    %279 = vmatprep.subr.mxu0 0.0
    %280 = vmatpush2.msra.mxu0 0.0
    %281 = vmatprep.subr.mxu0 0.0
    %282 = vmatpush2.msra.mxu0 0.0
    %283 = vmatprep.subr.mxu0 0.0
    %284 = vmatpush2.msra.mxu0 0.0
    %285 = vmatprep.subr.mxu0 0.0
    %286 = vmatpush2.msra.mxu0 0.0
    %287 = vmatprep.subr.mxu0 0.0
    %288 = vmatpush2.msra.mxu0 0.0
    %289 = vmatprep.subr.mxu0 0.0
    %290 = vmatpush2.msra.mxu0 0.0
    %291 = vmatprep.mubr.f32.mxu0 0.0
    %292 = vmatmul.mubr.f32.gmra.mxu0 %v211
    %v293 = vpop.f32.mrf.mxu0
    %v294 = vadd.f32 %v173, %v293
    %v295 = vpop.f32.mrf.mxu0
    %296 = vmatprep.mubr.f32.mxu0 0.0
    %297 = vmatmul.mubr.f32.gmra.mxu0 %v213
    %v298 = vpop.f32.mrf.mxu0
    %v299 = vadd.f32 %v178, %v298
    %v300 = vpop.f32.mrf.mxu0
    %301 = vmatprep.mubr.f32.mxu0 0.0
    %302 = vmatmul.mubr.f32.gmra.mxu0 %v215
    %v303 = vpop.f32.mrf.mxu0
    %v304 = vadd.f32 %v183, %v303
    %v305 = vpop.f32.mrf.mxu0
    %306 = vmatprep.mubr.f32.mxu0 0.0
    %307 = vmatmul.mubr.f32.gmra.mxu0 %v217
    %v308 = vpop.f32.mrf.mxu0
    %v309 = vadd.f32 %v188, %v308
    %v310 = vpop.f32.mrf.mxu0
    %311 = vmatprep.mubr.f32.mxu0 0.0
    %312 = vmatmul.mubr.f32.gmra.mxu0 %v219
    %v313 = vpop.f32.mrf.mxu0
    %v314 = vadd.f32 %v193, %v313
    %v315 = vpop.f32.mrf.mxu0
    %316 = vmatprep.mubr.f32.mxu0 0.0
    %317 = vmatmul.mubr.f32.gmra.mxu0 %v221
    %v318 = vpop.f32.mrf.mxu0
    %v319 = vadd.f32 %v198, %v318
    %v320 = vpop.f32.mrf.mxu0
    %321 = vmatprep.mubr.f32.mxu0 0.0
    %322 = vmatmul.mubr.f32.gmra.mxu0 %v223
    %v323 = vpop.f32.mrf.mxu0
    %v324 = vadd.f32 %v203, %v323
    %v325 = vpop.f32.mrf.mxu0
    %326 = vmatprep.mubr.f32.mxu0 0.0
    %327 = vmatmul.mubr.f32.gmra.mxu0 %v225
    %v328 = vpop.f32.mrf.mxu0
    %v329 = vadd.f32 %v208, %v328
    %v330 = vpop.f32.mrf.mxu0
    %331 = vdwg.mxu0
    %vm332 = vcmask 1045504
    %v333 = vrot.slane %v33, 2
    %v334 = vrot.slane %v34, 2
    %v335 = vsel %vm332, %v333, %v334
    %v336 = vrot.slane %v35, 2
    %v337 = vsel %vm332, %v334, %v336
    %v338 = vrot.slane %v36, 2
    %v339 = vsel %vm332, %v336, %v338
    %v340 = vrot.slane %v37, 2
    %v341 = vsel %vm332, %v338, %v340
    %v342 = vrot.slane %v38, 2
    %v343 = vrot.slane %v39, 2
    %v344 = vsel %vm332, %v342, %v343
    %v345 = vrot.slane %v40, 2
    %v346 = vsel %vm332, %v343, %v345
    %v347 = vrot.slane %v41, 2
    %v348 = vsel %vm332, %v345, %v347
    %v349 = vrot.slane %v42, 2
    %v350 = vsel %vm332, %v347, %v349
    %s351 = scalar_lea.vmem %s1, 128
    %v352 = vld [vmem:[%s351] sm:$0xff]
    %v353 = vld [vmem:[%s351 + $0x8] sm:$0xff]
    %v354 = vld [vmem:[%s351 + $0x10] sm:$0xff]
    %v355 = vld [vmem:[%s351 + $0x18] sm:$0xff]
    %v356 = vld [vmem:[%s351 + $0x20] sm:$0xff]
    %v357 = vld [vmem:[%s351 + $0x28] sm:$0xff]
    %v358 = vld [vmem:[%s351 + $0x30] sm:$0xff]
    %v359 = vld [vmem:[%s351 + $0x38] sm:$0xff]
    %v360 = vsel %vm89, %v335, 0
    %v362 = vsel %vm89, %v337, 0
    %v364 = vsel %vm89, %v339, 0
    %v366 = vsel %vm89, %v341, 0
    %v368 = vsel %vm89, %v344, 0
    %v370 = vsel %vm89, %v346, 0
    %v372 = vsel %vm89, %v348, 0
    %v374 = vsel %vm89, %v350, 0
    %376 = vmatprep.subr.mxu0 0.0
    %377 = vmatpush1.msra.mxu0 0.0
    %378 = vmatprep.subr.mxu0 0.0
    %379 = vmatpush1.msra.mxu0 0.0
    %380 = vmatprep.subr.mxu0 0.0
    %381 = vmatpush1.msra.mxu0 0.0
    %382 = vmatprep.subr.mxu0 0.0
    %383 = vmatpush1.msra.mxu0 0.0
    %384 = vmatprep.subr.mxu0 0.0
    %385 = vmatpush1.msra.mxu0 0.0
    %386 = vmatprep.subr.mxu0 0.0
    %387 = vmatpush1.msra.mxu0 0.0
    %388 = vmatprep.subr.mxu0 0.0
    %389 = vmatpush1.msra.mxu0 0.0
    %390 = vmatprep.subr.mxu0 0.0
    %391 = vmatpush1.msra.mxu0 0.0
    %392 = vmatprep.subr.mxu0 0.0
    %393 = vmatpush1.msra.mxu0 %v359
    %394 = vmatprep.subr.mxu0 0.0
    %395 = vmatpush1.msra.mxu0 %v358
    %396 = vmatprep.subr.mxu0 0.0
    %397 = vmatpush1.msra.mxu0 %v357
    %398 = vmatprep.subr.mxu0 0.0
    %399 = vmatpush1.msra.mxu0 %v356
    %400 = vmatprep.subr.mxu0 0.0
    %401 = vmatpush1.msra.mxu0 %v355
    %402 = vmatprep.subr.mxu0 0.0
    %403 = vmatpush1.msra.mxu0 %v354
    %404 = vmatprep.subr.mxu0 0.0
    %405 = vmatpush1.msra.mxu0 %v353
    %406 = vmatprep.subr.mxu0 0.0
    %407 = vmatpush1.msra.mxu0 %v352
    %408 = vmatprep.subr.mxu0 0.0
    %409 = vmatpush2.msra.mxu0 0.0
    %410 = vmatprep.subr.mxu0 0.0
    %411 = vmatpush2.msra.mxu0 0.0
    %412 = vmatprep.subr.mxu0 0.0
    %413 = vmatpush2.msra.mxu0 0.0
    %414 = vmatprep.subr.mxu0 0.0
    %415 = vmatpush2.msra.mxu0 0.0
    %416 = vmatprep.subr.mxu0 0.0
    %417 = vmatpush2.msra.mxu0 0.0
    %418 = vmatprep.subr.mxu0 0.0
    %419 = vmatpush2.msra.mxu0 0.0
    %420 = vmatprep.subr.mxu0 0.0
    %421 = vmatpush2.msra.mxu0 0.0
    %422 = vmatprep.subr.mxu0 0.0
    %423 = vmatpush2.msra.mxu0 0.0
    %424 = vmatprep.subr.mxu0 0.0
    %425 = vmatpush2.msra.mxu0 0.0
    %426 = vmatprep.subr.mxu0 0.0
    %427 = vmatpush2.msra.mxu0 0.0
    %428 = vmatprep.subr.mxu0 0.0
    %429 = vmatpush2.msra.mxu0 0.0
    %430 = vmatprep.subr.mxu0 0.0
    %431 = vmatpush2.msra.mxu0 0.0
    %432 = vmatprep.subr.mxu0 0.0
    %433 = vmatpush2.msra.mxu0 0.0
    %434 = vmatprep.subr.mxu0 0.0
    %435 = vmatpush2.msra.mxu0 0.0
    %436 = vmatprep.subr.mxu0 0.0
    %437 = vmatpush2.msra.mxu0 0.0
    %438 = vmatprep.subr.mxu0 0.0
    %439 = vmatpush2.msra.mxu0 0.0
    %440 = vmatprep.mubr.f32.mxu0 0.0
    %441 = vmatmul.mubr.f32.gmra.mxu0 %v360
    %v442 = vpop.f32.mrf.mxu0
    %v443 = vadd.f32 0.0, %v442
    %v444 = vpop.f32.mrf.mxu0
    %445 = vmatprep.mubr.f32.mxu0 0.0
    %446 = vmatmul.mubr.f32.gmra.mxu0 %v362
    %v447 = vpop.f32.mrf.mxu0
    %v448 = vadd.f32 0.0, %v447
    %v449 = vpop.f32.mrf.mxu0
    %450 = vmatprep.mubr.f32.mxu0 0.0
    %451 = vmatmul.mubr.f32.gmra.mxu0 %v364
    %v452 = vpop.f32.mrf.mxu0
    %v453 = vadd.f32 0.0, %v452
    %v454 = vpop.f32.mrf.mxu0
    %455 = vmatprep.mubr.f32.mxu0 0.0
    %456 = vmatmul.mubr.f32.gmra.mxu0 %v366
    %v457 = vpop.f32.mrf.mxu0
    %v458 = vadd.f32 0.0, %v457
    %v459 = vpop.f32.mrf.mxu0
    %460 = vmatprep.mubr.f32.mxu0 0.0
    %461 = vmatmul.mubr.f32.gmra.mxu0 %v368
    %v462 = vpop.f32.mrf.mxu0
    %v463 = vadd.f32 0.0, %v462
    %v464 = vpop.f32.mrf.mxu0
    %465 = vmatprep.mubr.f32.mxu0 0.0
    %466 = vmatmul.mubr.f32.gmra.mxu0 %v370
    %v467 = vpop.f32.mrf.mxu0
    %v468 = vadd.f32 0.0, %v467
    %v469 = vpop.f32.mrf.mxu0
    %470 = vmatprep.mubr.f32.mxu0 0.0
    %471 = vmatmul.mubr.f32.gmra.mxu0 %v372
    %v472 = vpop.f32.mrf.mxu0
    %v473 = vadd.f32 0.0, %v472
    %v474 = vpop.f32.mrf.mxu0
    %475 = vmatprep.mubr.f32.mxu0 0.0
    %476 = vmatmul.mubr.f32.gmra.mxu0 %v374
    %v477 = vpop.f32.mrf.mxu0
    %v478 = vadd.f32 0.0, %v477
    %v479 = vpop.f32.mrf.mxu0
    %480 = vdwg.mxu0
    %v481 = vadd.f32 %v294, %v443
    %v482 = vadd.f32 %v299, %v448
    %v483 = vadd.f32 %v304, %v453
    %v484 = vadd.f32 %v309, %v458
    %v485 = vadd.f32 %v314, %v463
    %v486 = vadd.f32 %v319, %v468
    %v487 = vadd.f32 %v324, %v473
    %v488 = vadd.f32 %v329, %v478
    %v489 = vld [vmem:[%s2] sm:$0x1]
    %v491 = vlaneseq
    %v492 = vshrl.u32 %v491, 7
    %v493 = vsub.s32 0, %v492
    %v494 = vrot.slane %v489, %v493
    %v496 = vmul.f32 %v481, %v494
    %v497 = vmul.f32 %v482, %v494
    %v498 = vmul.f32 %v483, %v494
    %v499 = vmul.f32 %v484, %v494
    %v500 = vmul.f32 %v485, %v494
    %v501 = vmul.f32 %v486, %v494
    %v502 = vmul.f32 %v487, %v494
    %v503 = vmul.f32 %v488, %v494
    %v504 = vld [vmem:[%s3] sm:$0x1]
    %v506 = vlaneseq
    %v507 = vshrl.u32 %v506, 7
    %v508 = vsub.s32 0, %v507
    %v509 = vrot.slane %v504, %v508
    %v511 = vadd.f32 %v496, %v509
    %v512 = vadd.f32 %v497, %v509
    %v513 = vadd.f32 %v498, %v509
    %v514 = vadd.f32 %v499, %v509
    %v515 = vadd.f32 %v500, %v509
    %v516 = vadd.f32 %v501, %v509
    %v517 = vadd.f32 %v502, %v509
    %v518 = vadd.f32 %v503, %v509
    %v519 = vmax.f32 %v511, 0.0
    %v520 = vmax.f32 %v512, 0.0
    %v521 = vmax.f32 %v513, 0.0
    %v522 = vmax.f32 %v514, 0.0
    %v523 = vmax.f32 %v515, 0.0
    %v524 = vmax.f32 %v516, 0.0
    %v525 = vmax.f32 %v517, 0.0
    %v526 = vmax.f32 %v518, 0.0
    %v527 = vld [vmem:[%s4] sm:$0xff]
    %v528 = vld [vmem:[%s4 + $0x8] sm:$0xff]
    %v529 = vld [vmem:[%s4 + $0x10] sm:$0xff]
    %v530 = vld [vmem:[%s4 + $0x18] sm:$0xff]
    %vm531 = vcmask 261120
    %v533 = vsel %vm531, %v519, 0
    %v536 = vsel %vm531, %v520, 0
    %v539 = vsel %vm531, %v521, 0
    %v542 = vsel %vm531, %v522, 0
    %v545 = vsel %vm531, %v523, 0
    %v548 = vsel %vm531, %v524, 0
    %v551 = vsel %vm531, %v525, 0
    %v554 = vsel %vm531, %v526, 0
    %556 = vmatprep.subr.mxu0 0.0
    %557 = vmatpush1.msra.mxu0 0.0
    %558 = vmatprep.subr.mxu0 0.0
    %559 = vmatpush1.msra.mxu0 0.0
    %560 = vmatprep.subr.mxu0 0.0
    %561 = vmatpush1.msra.mxu0 0.0
    %562 = vmatprep.subr.mxu0 0.0
    %563 = vmatpush1.msra.mxu0 0.0
    %564 = vmatprep.subr.mxu0 0.0
    %565 = vmatpush1.msra.mxu0 0.0
    %566 = vmatprep.subr.mxu0 0.0
    %567 = vmatpush1.msra.mxu0 0.0
    %568 = vmatprep.subr.mxu0 0.0
    %569 = vmatpush1.msra.mxu0 0.0
    %570 = vmatprep.subr.mxu0 0.0
    %571 = vmatpush1.msra.mxu0 0.0
    %572 = vmatprep.subr.mxu0 0.0
    %573 = vmatpush1.msra.mxu0 0.0
    %574 = vmatprep.subr.mxu0 0.0
    %575 = vmatpush1.msra.mxu0 0.0
    %576 = vmatprep.subr.mxu0 0.0
    %577 = vmatpush1.msra.mxu0 0.0
    %578 = vmatprep.subr.mxu0 0.0
    %579 = vmatpush1.msra.mxu0 0.0
    %580 = vmatprep.subr.mxu0 0.0
    %581 = vmatpush1.msra.mxu0 %v530
    %582 = vmatprep.subr.mxu0 0.0
    %583 = vmatpush1.msra.mxu0 %v529
    %584 = vmatprep.subr.mxu0 0.0
    %585 = vmatpush1.msra.mxu0 %v528
    %586 = vmatprep.subr.mxu0 0.0
    %587 = vmatpush1.msra.mxu0 %v527
    %588 = vmatprep.subr.mxu0 0.0
    %589 = vmatpush2.msra.mxu0 0.0
    %590 = vmatprep.subr.mxu0 0.0
    %591 = vmatpush2.msra.mxu0 0.0
    %592 = vmatprep.subr.mxu0 0.0
    %593 = vmatpush2.msra.mxu0 0.0
    %594 = vmatprep.subr.mxu0 0.0
    %595 = vmatpush2.msra.mxu0 0.0
    %596 = vmatprep.subr.mxu0 0.0
    %597 = vmatpush2.msra.mxu0 0.0
    %598 = vmatprep.subr.mxu0 0.0
    %599 = vmatpush2.msra.mxu0 0.0
    %600 = vmatprep.subr.mxu0 0.0
    %601 = vmatpush2.msra.mxu0 0.0
    %602 = vmatprep.subr.mxu0 0.0
    %603 = vmatpush2.msra.mxu0 0.0
    %604 = vmatprep.subr.mxu0 0.0
    %605 = vmatpush2.msra.mxu0 0.0
    %606 = vmatprep.subr.mxu0 0.0
    %607 = vmatpush2.msra.mxu0 0.0
    %608 = vmatprep.subr.mxu0 0.0
    %609 = vmatpush2.msra.mxu0 0.0
    %610 = vmatprep.subr.mxu0 0.0
    %611 = vmatpush2.msra.mxu0 0.0
    %612 = vmatprep.subr.mxu0 0.0
    %613 = vmatpush2.msra.mxu0 0.0
    %614 = vmatprep.subr.mxu0 0.0
    %615 = vmatpush2.msra.mxu0 0.0
    %616 = vmatprep.subr.mxu0 0.0
    %617 = vmatpush2.msra.mxu0 0.0
    %618 = vmatprep.subr.mxu0 0.0
    %619 = vmatpush2.msra.mxu0 0.0
    %620 = vmatprep.mubr.f32.mxu0 0.0
    %621 = vmatmul.mubr.f32.gmra.mxu0 %v533
    %v622 = vpop.f32.mrf.mxu0
    %v623 = vadd.f32 0.0, %v622
    %v624 = vpop.f32.mrf.mxu0
    %625 = vmatprep.mubr.f32.mxu0 0.0
    %626 = vmatmul.mubr.f32.gmra.mxu0 %v536
    %v627 = vpop.f32.mrf.mxu0
    %v628 = vadd.f32 0.0, %v627
    %v629 = vpop.f32.mrf.mxu0
    %630 = vmatprep.mubr.f32.mxu0 0.0
    %631 = vmatmul.mubr.f32.gmra.mxu0 %v539
    %v632 = vpop.f32.mrf.mxu0
    %v633 = vadd.f32 0.0, %v632
    %v634 = vpop.f32.mrf.mxu0
    %635 = vmatprep.mubr.f32.mxu0 0.0
    %636 = vmatmul.mubr.f32.gmra.mxu0 %v542
    %v637 = vpop.f32.mrf.mxu0
    %v638 = vadd.f32 0.0, %v637
    %v639 = vpop.f32.mrf.mxu0
    %640 = vmatprep.mubr.f32.mxu0 0.0
    %641 = vmatmul.mubr.f32.gmra.mxu0 %v545
    %v642 = vpop.f32.mrf.mxu0
    %v643 = vadd.f32 0.0, %v642
    %v644 = vpop.f32.mrf.mxu0
    %645 = vmatprep.mubr.f32.mxu0 0.0
    %646 = vmatmul.mubr.f32.gmra.mxu0 %v548
    %v647 = vpop.f32.mrf.mxu0
    %v648 = vadd.f32 0.0, %v647
    %v649 = vpop.f32.mrf.mxu0
    %650 = vmatprep.mubr.f32.mxu0 0.0
    %651 = vmatmul.mubr.f32.gmra.mxu0 %v551
    %v652 = vpop.f32.mrf.mxu0
    %v653 = vadd.f32 0.0, %v652
    %v654 = vpop.f32.mrf.mxu0
    %655 = vmatprep.mubr.f32.mxu0 0.0
    %656 = vmatmul.mubr.f32.gmra.mxu0 %v554
    %v657 = vpop.f32.mrf.mxu0
    %v658 = vadd.f32 0.0, %v657
    %v659 = vpop.f32.mrf.mxu0
    %660 = vdwg.mxu0
    %v661 = vld [vmem:[%s5] sm:$0x1]
    %v663 = vlaneseq
    %v664 = vshrl.u32 %v663, 7
    %v665 = vsub.s32 0, %v664
    %v666 = vrot.slane %v661, %v665
    %v668 = vmul.f32 %v623, %v666
    %v669 = vmul.f32 %v628, %v666
    %v670 = vmul.f32 %v633, %v666
    %v671 = vmul.f32 %v638, %v666
    %v672 = vmul.f32 %v643, %v666
    %v673 = vmul.f32 %v648, %v666
    %v674 = vmul.f32 %v653, %v666
    %v675 = vmul.f32 %v658, %v666
    %v676 = vld [vmem:[%s6] sm:$0x1]
    %v678 = vlaneseq
    %v679 = vshrl.u32 %v678, 7
    %v680 = vsub.s32 0, %v679
    %v681 = vrot.slane %v676, %v680
    %v683 = vadd.f32 %v668, %v681
    %v684 = vadd.f32 %v669, %v681
    %v685 = vadd.f32 %v670, %v681
    %v686 = vadd.f32 %v671, %v681
    %v687 = vadd.f32 %v672, %v681
    %v688 = vadd.f32 %v673, %v681
    %v689 = vadd.f32 %v674, %v681
    %v690 = vadd.f32 %v675, %v681
    %v691 = vmax.f32 %v683, 0.0
    %v692 = vmax.f32 %v684, 0.0
    %v693 = vmax.f32 %v685, 0.0
    %v694 = vmax.f32 %v686, 0.0
    %v695 = vmax.f32 %v687, 0.0
    %v696 = vmax.f32 %v688, 0.0
    %v697 = vmax.f32 %v689, 0.0
    %v698 = vmax.f32 %v690, 0.0
    %v699 = vld [vmem:[%s7] sm:$0xff]
    %v700 = vld [vmem:[%s8] sm:$0xff]
    %702 = vset.pattern.permute.xlu0 0
    %703 = vperm.xlu0 %702, %v700
    %v704 = vpop.permute.xlu0 %703
    %v707 = vsel %vm531, %v699, 0
    %v710 = vsel %vm531, %v691, 0
    %v713 = vsel %vm531, %v692, 0
    %v716 = vsel %vm531, %v693, 0
    %v719 = vsel %vm531, %v694, 0
    %v722 = vsel %vm531, %v695, 0
    %v725 = vsel %vm531, %v696, 0
    %v728 = vsel %vm531, %v697, 0
    %v731 = vsel %vm531, %v698, 0
    %733 = vmatprep.subr.mxu0 0.0
    %734 = vmatpush1.xpose.msra.mxu0 0.0
    %735 = vmatprep.subr.mxu0 0.0
    %736 = vmatpush1.xpose.msra.mxu0 0.0
    %737 = vmatprep.subr.mxu0 0.0
    %738 = vmatpush1.xpose.msra.mxu0 0.0
    %739 = vmatprep.subr.mxu0 0.0
    %740 = vmatpush1.xpose.msra.mxu0 0.0
    %741 = vmatprep.subr.mxu0 0.0
    %742 = vmatpush1.xpose.msra.mxu0 0.0
    %743 = vmatprep.subr.mxu0 0.0
    %744 = vmatpush1.xpose.msra.mxu0 0.0
    %745 = vmatprep.subr.mxu0 0.0
    %746 = vmatpush1.xpose.msra.mxu0 0.0
    %747 = vmatprep.subr.mxu0 0.0
    %748 = vmatpush1.xpose.msra.mxu0 0.0
    %749 = vmatprep.subr.mxu0 0.0
    %750 = vmatpush1.xpose.msra.mxu0 %v731
    %751 = vmatprep.subr.mxu0 0.0
    %752 = vmatpush1.xpose.msra.mxu0 %v728
    %753 = vmatprep.subr.mxu0 0.0
    %754 = vmatpush1.xpose.msra.mxu0 %v725
    %755 = vmatprep.subr.mxu0 0.0
    %756 = vmatpush1.xpose.msra.mxu0 %v722
    %757 = vmatprep.subr.mxu0 0.0
    %758 = vmatpush1.xpose.msra.mxu0 %v719
    %759 = vmatprep.subr.mxu0 0.0
    %760 = vmatpush1.xpose.msra.mxu0 %v716
    %761 = vmatprep.subr.mxu0 0.0
    %762 = vmatpush1.xpose.msra.mxu0 %v713
    %763 = vmatprep.subr.mxu0 0.0
    %764 = vmatpush1.xpose.msra.mxu0 %v710
    %765 = vmatprep.subr.mxu0 0.0
    %766 = vmatpush2.xpose.msra.mxu0 0.0
    %767 = vmatprep.subr.mxu0 0.0
    %768 = vmatpush2.xpose.msra.mxu0 0.0
    %769 = vmatprep.subr.mxu0 0.0
    %770 = vmatpush2.xpose.msra.mxu0 0.0
    %771 = vmatprep.subr.mxu0 0.0
    %772 = vmatpush2.xpose.msra.mxu0 0.0
    %773 = vmatprep.subr.mxu0 0.0
    %774 = vmatpush2.xpose.msra.mxu0 0.0
    %775 = vmatprep.subr.mxu0 0.0
    %776 = vmatpush2.xpose.msra.mxu0 0.0
    %777 = vmatprep.subr.mxu0 0.0
    %778 = vmatpush2.xpose.msra.mxu0 0.0
    %779 = vmatprep.subr.mxu0 0.0
    %780 = vmatpush2.xpose.msra.mxu0 0.0
    %781 = vmatprep.subr.mxu0 0.0
    %782 = vmatpush2.xpose.msra.mxu0 0.0
    %783 = vmatprep.subr.mxu0 0.0
    %784 = vmatpush2.xpose.msra.mxu0 0.0
    %785 = vmatprep.subr.mxu0 0.0
    %786 = vmatpush2.xpose.msra.mxu0 0.0
    %787 = vmatprep.subr.mxu0 0.0
    %788 = vmatpush2.xpose.msra.mxu0 0.0
    %789 = vmatprep.subr.mxu0 0.0
    %790 = vmatpush2.xpose.msra.mxu0 0.0
    %791 = vmatprep.subr.mxu0 0.0
    %792 = vmatpush2.xpose.msra.mxu0 0.0
    %793 = vmatprep.subr.mxu0 0.0
    %794 = vmatpush2.xpose.msra.mxu0 0.0
    %795 = vmatprep.subr.mxu0 0.0
    %796 = vmatpush2.xpose.msra.mxu0 0.0
    %797 = vmatprep.mubr.f32.mxu0 0.0
    %798 = vmatmul.mubr.f32.gmra.mxu0 %v707
    %v799 = vpop.f32.mrf.mxu0
    %v800 = vadd.f32 %v704, %v799
    %v801 = vpop.f32.mrf.mxu0
    %802 = vdwg.mxu0
    %803 = vst.msk [vmem:[#allocation2] sm:$0xff] %vm89, %v800
    // Predicated region
    $region38: #{tpu_custom_call.1} parent=1 // pred_check
      _
    $region39: #{tpu_custom_call.1} parent=1 // pred_check_branch
      %805 = sbr.rel (0) target = $region41
    $region40: #{tpu_custom_call.1} parent=1 // pred_region
      %s807 = ssub.s32 128, 128
      %808 = vsyncadd [#allocation3], %s807
      %s810 = sshll.u32 [#allocation2], 4
      %s811 = int_to_ptr.vmem [resolvable:$true] %s810
      %813 = dma.vmem_to_hbm [thread:$0]  %s811, 128, %s9, [#allocation3]
    $region41: #{tpu_custom_call.1} parent=1 // pred_fallthru
      _
    // Predicated region
    $region42: #{tpu_custom_call.1} parent=1 // pred_check
      _
    $region43: #{tpu_custom_call.1} parent=1 // pred_check_branch
      %815 = sbr.rel (0) target = $region45
    $region44: #{tpu_custom_call.1} parent=1 // pred_region
      %816 = dma.done [#allocation3], 128
    $region45: #{tpu_custom_call.1} parent=1 // pred_fallthru
      _
    %817 = vsyncpa [#allocation3], 1

</llo_original>
